<compile_context>
chip_gen: v5e
topology: v5e:2x2
jax: 0.10.0
libtpu: 0.0.40
codegen_flags: <defaults>
</compile_context>

<pallas_src>
import functools

import jax
import jax.numpy as jnp
from jax.experimental import pallas as pl
from jax.experimental.pallas import tpu as pltpu

EPS = 1e-5
_LANE = 128
_H_CACHE_BUDGET_BYTES = 16 * 1024 * 1024  # safe under the 32 MiB scoped VMEM limit


def _round_up(a: int, b: int) -> int:
    return (a + b - 1) // b * b


def mlp_layer_kernel(x_ref, w1_ref, w2_ref, gamma_ref, beta_ref, o_ref,
                     sum_ref, sq_ref, scale_ref, shift_ref, *opt_scratch,
                     n_rows, tile_n, cache_h):
    phase = pl.program_id(0)   # 0: accumulate batch stats, 1: normalize + emit
    tile = pl.program_id(1)    # batch-tile index
    h_cache_ref = opt_scratch[0] if cache_h else None

    def matmul1():
        # bf16 MXU operands, f32 accumulation.  The f32 -> bf16 cast of the x
        # tile is a VPU op (essentially free).
        return jnp.dot(x_ref[...].astype(jnp.bfloat16), w1_ref[...],
                       preferred_element_type=jnp.float32)

    # ---------------- phase 0: per-feature sum and sum-of-squares -----------
    @pl.when((phase == 0) & (tile == 0))
    def _init_stats():
        sum_ref[...] = jnp.zeros_like(sum_ref)
        sq_ref[...] = jnp.zeros_like(sq_ref)

    @pl.when(phase == 0)
    def _stats():
        h = matmul1()
        # Mask rows past the true batch size: the last tile may be ragged and
        # its VMEM contents beyond N are undefined, so they must contribute
        # nothing to the statistics.
        rows = tile * tile_n + jax.lax.broadcasted_iota(jnp.int32, h.shape, 0)
        h = jnp.where(rows < n_rows, h, 0.0)
        if cache_h:
            h_cache_ref[tile] = h.astype(jnp.bfloat16)
        # Per-sublane partials: splitting the sublane axis by 8 makes the
        # axis-0 reduction pure VALU adds (no per-step XLU tree); the single
        # cross-sublane reduce happens once in _fold_bn.
        h3 = h.reshape(tile_n // 8, 8, h.shape[-1])
        sum_ref[...] = sum_ref[...] + jnp.sum(h3, axis=0)
        sq_ref[...] = sq_ref[...] + jnp.sum(h3 * h3, axis=0)
        # NOTE: no o_ref store here.  The output window stays pinned at (0, 0)
        # for all of phase 0 and is fully overwritten at (phase=1, tile=0)
        # before its first writeback, so a phase-0 store would be dead work.

    # --------- phase 1, first tile: fold BN into one scale / shift ----------
    @pl.when((phase == 1) & (tile == 0))
    def _fold_bn():
        inv_n = jnp.float32(1.0 / n_rows)           # divide by the TRUE batch
        s = jnp.sum(sum_ref[...], axis=0, keepdims=True)
        ss = jnp.sum(sq_ref[...], axis=0, keepdims=True)
        mean = s * inv_n
        # Biased variance (training-mode BatchNorm1d), guarded against f32
        # cancellation.  TODO(synk): use a centered second pass if activations
        # can have |mean| >> std.
        var = jnp.maximum(ss * inv_n - mean * mean, 0.0)
        scale = gamma_ref[...] * jax.lax.rsqrt(var + EPS)
        scale_ref[...] = scale
        shift_ref[...] = beta_ref[...] - mean * scale

    # ------------- phase 1: normalize + ReLU + second linear -----------------
    @pl.when(phase == 1)
    def _emit():
        if cache_h:
            h = h_cache_ref[tile].astype(jnp.float32)
        else:
            h = matmul1()
        h_bn = h * scale_ref[...] + shift_ref[...]   # f32 VPU math
        h_act = jnp.maximum(h_bn, 0.0)
        o_ref[...] = jnp.dot(h_act.astype(jnp.bfloat16), w2_ref[...],
                             preferred_element_type=jnp.float32
                             ).astype(o_ref.dtype)


def prepare_params(w1, w2, gamma, beta):
    """One-time weight prep: pad hidden/out dims to 128 lanes, transpose, bf16.

    w1: (hidden, in) PyTorch Linear layout;  w2: (out, hidden).
    """
    d_hid, d_in = w1.shape
    d_out = w2.shape[0]
    d_hid_p = _round_up(d_hid, _LANE)
    d_out_p = _round_up(d_out, _LANE)

    w1_p = jnp.zeros((d_in, d_hid_p), jnp.bfloat16)
    w1_p = w1_p.at[:, :d_hid].set(jnp.asarray(w1, jnp.float32).T.astype(jnp.bfloat16))
    w2_p = jnp.zeros((d_hid_p, d_out_p), jnp.bfloat16)
    w2_p = w2_p.at[:d_hid, :d_out].set(jnp.asarray(w2, jnp.float32).T.astype(jnp.bfloat16))

    # Padded hidden columns get gamma = beta = 0 so they stay exactly zero.
    gamma_p = jnp.zeros((1, d_hid_p), jnp.float32).at[0, :d_hid].set(
        jnp.asarray(gamma, jnp.float32))
    beta_p = jnp.zeros((1, d_hid_p), jnp.float32).at[0, :d_hid].set(
        jnp.asarray(beta, jnp.float32))

    return dict(w1=w1_p, w2=w2_p, gamma=gamma_p, beta=beta_p,
                d_in=d_in, d_hid=d_hid, d_out=d_out,
                d_hid_p=d_hid_p, d_out_p=d_out_p)


def mlp_layer(x, params, *, tile_n=1024, compact=True):
    """Apply the MLP_layer forward.  x: (N, d_in) f32 (passed in untouched)."""
    n, d_in = x.shape
    assert d_in == params["d_in"]
    d_hid_p = params["d_hid_p"]
    d_out_p = params["d_out_p"]

    # Batch tile: multiple of 16 (bf16 sublane packing), large enough to
    # amortize per-grid-step overhead and give big output DMAs.
    tile_n = max(16, min(_round_up(tile_n, 16), _round_up(n, 16)))
    n_tiles = pl.cdiv(n, tile_n)

    # Cache the hidden activations in VMEM when they fit the budget so phase 1
    # does not re-stream x or redo matmul1; otherwise fall back to recompute.
    cache_h = (n_tiles * tile_n * d_hid_p * 2) <= _H_CACHE_BUDGET_BYTES

    scratch = [
        pltpu.VMEM((8, d_hid_p), jnp.float32),   # per-sublane running sum
        pltpu.VMEM((8, d_hid_p), jnp.float32),   # per-sublane running sum-of-squares
        pltpu.VMEM((1, d_hid_p), jnp.float32),   # folded BN scale
        pltpu.VMEM((1, d_hid_p), jnp.float32),   # folded BN shift
    ]
    if cache_h:
        scratch.append(pltpu.VMEM((n_tiles, tile_n, d_hid_p), jnp.bfloat16))
        x_index = lambda p, t: ((1 - p) * t, 0)   # streamed phase 0, pinned phase 1
    else:
        x_index = lambda p, t: (t, 0)             # streamed in both phases

    grid_spec = pltpu.PrefetchScalarGridSpec(
        num_scalar_prefetch=0,
        grid=(2, n_tiles),                        # (phase, batch tile)
        in_specs=[
            pl.BlockSpec((tile_n, d_in), x_index),                   # x tile (f32)
            pl.BlockSpec((d_in, d_hid_p), lambda p, t: (0, 0)),      # W1 (resident)
            pl.BlockSpec((d_hid_p, d_out_p), lambda p, t: (0, 0)),   # W2 (resident)
            pl.BlockSpec((1, d_hid_p), lambda p, t: (0, 0)),         # gamma
            pl.BlockSpec((1, d_hid_p), lambda p, t: (0, 0)),         # beta
        ],
        # Phase 0 pins the output window to block 0 (t * p == 0) so the stats
        # pass never writes anything back; phase 1 walks the tiles and emits
        # one lane-dense bf16 store each.
        out_specs=pl.BlockSpec((tile_n, d_out_p), lambda p, t: (t * p, 0)),
        scratch_shapes=scratch,
    )

    mm1 = 2 * n * d_in * d_hid_p
    mm2 = 2 * n * d_hid_p * d_out_p
    cost = pl.CostEstimate(
        flops=(mm1 if cache_h else 2 * mm1) + mm2,
        transcendentals=d_hid_p,                           # rsqrt per feature
        bytes_accessed=((1 if cache_h else 2) * n * d_in * 4   # x streamed once/twice
                        + d_in * d_hid_p * 2                   # W1 (bf16)
                        + d_hid_p * d_out_p * 2                # W2 (bf16)
                        + 2 * d_hid_p * 4                      # gamma/beta (f32)
                        + n * d_out_p * 2),                    # output (bf16)
    )

    out = pl.pallas_call(
        functools.partial(mlp_layer_kernel, n_rows=n, tile_n=tile_n,
                          cache_h=cache_h),
        out_shape=jax.ShapeDtypeStruct((n, d_out_p), jnp.bfloat16),
        grid_spec=grid_spec,
        compiler_params=pltpu.CompilerParams(
            # Phase axis carries the stats dependency; phase-0 tiles accumulate
            # into scratch sequentially -> both "arbitrary".
            dimension_semantics=("arbitrary", "arbitrary"),
            vmem_limit_bytes=32 * 1024 * 1024,
        ),
        cost_estimate=cost,
    )(x, params["w1"], params["w2"], params["gamma"], params["beta"])

    if compact:
        # Cheap bf16 feature slice; set compact=False to hand the padded
        # lane-dense layout straight to the downstream consumer.
        return out[:, :params["d_out"]]
    return out


def mlp_layer_ref(x, w1, w2, gamma, beta):
    """Pure-JAX f32 reference of the PyTorch forward (training-mode BN)."""
    h = x @ w1.T
    mean = jnp.mean(h, axis=0, keepdims=True)
    var = jnp.mean((h - mean) ** 2, axis=0, keepdims=True)
    h = (h - mean) / jnp.sqrt(var + EPS) * gamma[None, :] + beta[None, :]
    h = jnp.maximum(h, 0.0)
    return h @ w2.T


if __name__ == "__main__":
    # Small shapes consistent with the module: batch=8, input_dim=16,
    # hidden_dim=32, output_dim=16.
    N, D_IN, D_HID, D_OUT = 8, 16, 32, 16

    key = jax.random.PRNGKey(0)
    kx, kw1, kw2 = jax.random.split(key, 3)

    x = jax.random.normal(kx, (N, D_IN), dtype=jnp.float32)
    # PyTorch Linear layout (out_features, in_features), bias-free.
    w1 = jax.random.normal(kw1, (D_HID, D_IN), dtype=jnp.float32) * (1.0 / jnp.sqrt(D_IN))
    w2 = jax.random.normal(kw2, (D_OUT, D_HID), dtype=jnp.float32) * (1.0 / jnp.sqrt(D_HID))
    # BatchNorm1d default affine params at init.
    gamma = jnp.ones((D_HID,), dtype=jnp.float32)
    beta = jnp.zeros((D_HID,), dtype=jnp.float32)

    params = prepare_params(w1, w2, gamma, beta)   # one-time weight prep
    out = mlp_layer(x, params)
    out = jax.block_until_ready(out)

    ref = mlp_layer_ref(x, w1, w2, gamma, beta)
    assert out.shape == (N, D_OUT)
    # bf16 MXU operands + bf16 output (f32 accumulation / f32 BN math) ->
    # ~1e-2-level deviation vs the f32 PyTorch-style reference.
    assert jnp.allclose(out.astype(jnp.float32), ref, atol=8e-2, rtol=8e-2), \
        "mismatch vs reference"

    print("KERNEL_OK")
</pallas_src>

<mosaic_0001>
module attributes {stable_mosaic.version = 11 : i64} {
  func.func @mlp_layer_kernel(%arg0: i32, %arg1: i32, %arg2: memref<16x16xf32, #tpu.memory_space<vmem>>, %arg3: memref<16x128xbf16, #tpu.memory_space<vmem>>, %arg4: memref<128x128xbf16, #tpu.memory_space<vmem>>, %arg5: memref<1x128xf32, #tpu.memory_space<vmem>>, %arg6: memref<1x128xf32, #tpu.memory_space<vmem>>, %arg7: memref<16x128xbf16, #tpu.memory_space<vmem>>, %arg8: memref<8x128xf32, #tpu.memory_space<vmem>>, %arg9: memref<8x128xf32, #tpu.memory_space<vmem>>, %arg10: memref<1x128xf32, #tpu.memory_space<vmem>>, %arg11: memref<1x128xf32, #tpu.memory_space<vmem>>, %arg12: memref<1x16x128xbf16, #tpu.memory_space<vmem>>) attributes {dimension_semantics = [#tpu.dimension_semantics<arbitrary>, #tpu.dimension_semantics<arbitrary>], iteration_bounds = array<i64: 2, 1>, scalar_prefetch = 0 : i64, scratch_operands = 5 : i64, tpu.core_type = #tpu.core_type<tc>, window_params = [{transform_indices = @transform_0, window_bounds = array<i64: 16, 16>}, {pipeline_mode = #tpu.pipeline_mode<synchronous>, transform_indices = @transform_1, window_bounds = array<i64: 16, 128>}, {pipeline_mode = #tpu.pipeline_mode<synchronous>, transform_indices = @transform_2, window_bounds = array<i64: 128, 128>}, {pipeline_mode = #tpu.pipeline_mode<synchronous>, transform_indices = @transform_3, window_bounds = array<i64: 1, 128>}, {pipeline_mode = #tpu.pipeline_mode<synchronous>, transform_indices = @transform_4, window_bounds = array<i64: 1, 128>}, {transform_indices = @transform_5, window_bounds = array<i64: 16, 128>}]} {
    %c0_i32 = arith.constant 0 : i32
    %0 = arith.cmpi eq, %arg0, %c0_i32 : i32
    %c0_i32_0 = arith.constant 0 : i32
    %1 = arith.cmpi eq, %arg1, %c0_i32_0 : i32
    %2 = arith.andi %0, %1 : i1
    %3 = arith.extui %2 : i1 to i32
    %c0_i32_1 = arith.constant 0 : i32
    %4 = arith.cmpi ne, %3, %c0_i32_1 : i32
    scf.if %4 {
      %cst = arith.constant 0.000000e+00 : f32
      %16 = vector.broadcast %cst : f32 to vector<8x128xf32>
      %c0 = arith.constant 0 : index
      %c0_8 = arith.constant 0 : index
      %17 = vector.load %arg8[%c0, %c0_8] : memref<8x128xf32, #tpu.memory_space<vmem>>, vector<8x128xf32>
      tpu.vector_store %arg8[%c0, %c0_8], %16 {strides = array<i32>} : memref<8x128xf32, #tpu.memory_space<vmem>>, vector<8x128xf32>,
      %cst_9 = arith.constant 0.000000e+00 : f32
      %18 = vector.broadcast %cst_9 : f32 to vector<8x128xf32>
      %c0_10 = arith.constant 0 : index
      %c0_11 = arith.constant 0 : index
      %19 = vector.load %arg9[%c0_10, %c0_11] : memref<8x128xf32, #tpu.memory_space<vmem>>, vector<8x128xf32>
      tpu.vector_store %arg9[%c0_10, %c0_11], %18 {strides = array<i32>} : memref<8x128xf32, #tpu.memory_space<vmem>>, vector<8x128xf32>,
    } else {
    }
    %c0_i32_2 = arith.constant 0 : i32
    %5 = arith.cmpi eq, %arg0, %c0_i32_2 : i32
    %6 = arith.extui %5 : i1 to i32
    %c0_i32_3 = arith.constant 0 : i32
    %7 = arith.cmpi ne, %6, %c0_i32_3 : i32
    scf.if %7 {
      %c0 = arith.constant 0 : index
      %c0_8 = arith.constant 0 : index
      %16 = vector.load %arg2[%c0, %c0_8] : memref<16x16xf32, #tpu.memory_space<vmem>>, vector<16x16xf32>
      %17 = arith.truncf %16 : vector<16x16xf32> to vector<16x16xbf16>
      %c0_9 = arith.constant 0 : index
      %c0_10 = arith.constant 0 : index
      %18 = vector.load %arg3[%c0_9, %c0_10] : memref<16x128xbf16, #tpu.memory_space<vmem>>, vector<16x128xbf16>
      %cst = arith.constant dense<0.000000e+00> : vector<16x128xf32>
      %19 = tpu.matmul %17, %18, %cst {dimension_numbers = #tpu.dot_dimension_numbers<[1], [0], [0], [1], [0, 0, 1, 1], [], []>} : vector<16x16xbf16>, vector<16x128xbf16>, vector<16x128xf32> -> vector<16x128xf32>
      %c16_i32 = arith.constant 16 : i32
      %20 = arith.muli %arg1, %c16_i32 : i32
      %21 = tpu.iota {dimensions = array<i32: 0>} : vector<16x128xi32>
      %22 = vector.broadcast %20 : i32 to vector<16x128xi32>
      %23 = arith.addi %22, %21 : vector<16x128xi32>
      %c8_i32 = arith.constant 8 : i32
      %24 = vector.broadcast %c8_i32 : i32 to vector<16x128xi32>
      %25 = arith.cmpi slt, %23, %24 : vector<16x128xi32>
      %cst_11 = arith.constant 0.000000e+00 : f32
      %26 = vector.broadcast %cst_11 : f32 to vector<16x128xf32>
      %27 = arith.select %25, %19, %26 : vector<16x128xi1>, vector<16x128xf32>
      %28 = arith.truncf %27 : vector<16x128xf32> to vector<16x128xbf16>
      %29 = arith.index_cast %arg1 : i32 to index
      %c0_12 = arith.constant 0 : index
      %c0_13 = arith.constant 0 : index
      %30 = vector.load %arg12[%29, %c0_12, %c0_13] : memref<1x16x128xbf16, #tpu.memory_space<vmem>>, vector<1x16x128xbf16>
      %31 = vector.shape_cast %30 : vector<1x16x128xbf16> to vector<16x128xbf16>
      %32 = vector.shape_cast %28 : vector<16x128xbf16> to vector<1x16x128xbf16>
      tpu.vector_store %arg12[%29, %c0_12, %c0_13], %32 {strides = array<i32>} : memref<1x16x128xbf16, #tpu.memory_space<vmem>>, vector<1x16x128xbf16>,
      %33 = vector.shape_cast %27 : vector<16x128xf32> to vector<2x8x128xf32>
      %c0_14 = arith.constant 0 : index
      %c0_15 = arith.constant 0 : index
      %34 = vector.load %arg8[%c0_14, %c0_15] : memref<8x128xf32, #tpu.memory_space<vmem>>, vector<8x128xf32>
      %cst_16 = arith.constant dense<0.000000e+00> : vector<8x128xf32>
      %35 = vector.multi_reduction <add>, %33, %cst_16 [0] : vector<2x8x128xf32> to vector<8x128xf32>
      %36 = arith.addf %34, %35 : vector<8x128xf32>
      %c0_17 = arith.constant 0 : index
      %c0_18 = arith.constant 0 : index
      %37 = vector.load %arg8[%c0_17, %c0_18] : memref<8x128xf32, #tpu.memory_space<vmem>>, vector<8x128xf32>
      tpu.vector_store %arg8[%c0_17, %c0_18], %36 {strides = array<i32>} : memref<8x128xf32, #tpu.memory_space<vmem>>, vector<8x128xf32>,
      %c0_19 = arith.constant 0 : index
      %c0_20 = arith.constant 0 : index
      %38 = vector.load %arg9[%c0_19, %c0_20] : memref<8x128xf32, #tpu.memory_space<vmem>>, vector<8x128xf32>
      %39 = arith.mulf %33, %33 : vector<2x8x128xf32>
      %cst_21 = arith.constant dense<0.000000e+00> : vector<8x128xf32>
      %40 = vector.multi_reduction <add>, %39, %cst_21 [0] : vector<2x8x128xf32> to vector<8x128xf32>
      %41 = arith.addf %38, %40 : vector<8x128xf32>
      %c0_22 = arith.constant 0 : index
      %c0_23 = arith.constant 0 : index
      %42 = vector.load %arg9[%c0_22, %c0_23] : memref<8x128xf32, #tpu.memory_space<vmem>>, vector<8x128xf32>
      tpu.vector_store %arg9[%c0_22, %c0_23], %41 {strides = array<i32>} : memref<8x128xf32, #tpu.memory_space<vmem>>, vector<8x128xf32>,
    } else {
    }
    %c1_i32 = arith.constant 1 : i32
    %8 = arith.cmpi eq, %arg0, %c1_i32 : i32
    %c0_i32_4 = arith.constant 0 : i32
    %9 = arith.cmpi eq, %arg1, %c0_i32_4 : i32
    %10 = arith.andi %8, %9 : i1
    %11 = arith.extui %10 : i1 to i32
    %c0_i32_5 = arith.constant 0 : i32
    %12 = arith.cmpi ne, %11, %c0_i32_5 : i32
    scf.if %12 {
      %c0 = arith.constant 0 : index
      %c0_8 = arith.constant 0 : index
      %16 = vector.load %arg8[%c0, %c0_8] : memref<8x128xf32, #tpu.memory_space<vmem>>, vector<8x128xf32>
      %cst = arith.constant dense<0.000000e+00> : vector<128xf32>
      %17 = vector.multi_reduction <add>, %16, %cst [0] : vector<8x128xf32> to vector<128xf32>
      %18 = vector.shape_cast %17 : vector<128xf32> to vector<1x128xf32>
      %c0_9 = arith.constant 0 : index
      %c0_10 = arith.constant 0 : index
      %19 = vector.load %arg9[%c0_9, %c0_10] : memref<8x128xf32, #tpu.memory_space<vmem>>, vector<8x128xf32>
      %cst_11 = arith.constant dense<0.000000e+00> : vector<128xf32>
      %20 = vector.multi_reduction <add>, %19, %cst_11 [0] : vector<8x128xf32> to vector<128xf32>
      %21 = vector.shape_cast %20 : vector<128xf32> to vector<1x128xf32>
      %cst_12 = arith.constant 1.250000e-01 : f32
      %22 = vector.broadcast %cst_12 : f32 to vector<1x128xf32>
      %23 = arith.mulf %18, %22 : vector<1x128xf32>
      %cst_13 = arith.constant 1.250000e-01 : f32
      %24 = vector.broadcast %cst_13 : f32 to vector<1x128xf32>
      %25 = arith.mulf %21, %24 : vector<1x128xf32>
      %26 = arith.mulf %23, %23 : vector<1x128xf32>
      %27 = arith.subf %25, %26 : vector<1x128xf32>
      %cst_14 = arith.constant 0.000000e+00 : f32
      %28 = vector.broadcast %cst_14 : f32 to vector<1x128xf32>
      %29 = arith.maximumf %27, %28 : vector<1x128xf32>
      %c0_15 = arith.constant 0 : index
      %c0_16 = arith.constant 0 : index
      %30 = vector.load %arg5[%c0_15, %c0_16] : memref<1x128xf32, #tpu.memory_space<vmem>>, vector<1x128xf32>
      %cst_17 = arith.constant 9.99999974E-6 : f32
      %31 = vector.broadcast %cst_17 : f32 to vector<1x128xf32>
      %32 = arith.addf %29, %31 : vector<1x128xf32>
      %33 = math.rsqrt %32 : vector<1x128xf32>
      %34 = arith.mulf %30, %33 : vector<1x128xf32>
      %c0_18 = arith.constant 0 : index
      %c0_19 = arith.constant 0 : index
      %35 = vector.load %arg10[%c0_18, %c0_19] : memref<1x128xf32, #tpu.memory_space<vmem>>, vector<1x128xf32>
      tpu.vector_store %arg10[%c0_18, %c0_19], %34 {strides = array<i32>} : memref<1x128xf32, #tpu.memory_space<vmem>>, vector<1x128xf32>,
      %c0_20 = arith.constant 0 : index
      %c0_21 = arith.constant 0 : index
      %36 = vector.load %arg6[%c0_20, %c0_21] : memref<1x128xf32, #tpu.memory_space<vmem>>, vector<1x128xf32>
      %37 = arith.mulf %23, %34 : vector<1x128xf32>
      %38 = arith.subf %36, %37 : vector<1x128xf32>
      %c0_22 = arith.constant 0 : index
      %c0_23 = arith.constant 0 : index
      %39 = vector.load %arg11[%c0_22, %c0_23] : memref<1x128xf32, #tpu.memory_space<vmem>>, vector<1x128xf32>
      tpu.vector_store %arg11[%c0_22, %c0_23], %38 {strides = array<i32>} : memref<1x128xf32, #tpu.memory_space<vmem>>, vector<1x128xf32>,
    } else {
    }
    %c1_i32_6 = arith.constant 1 : i32
    %13 = arith.cmpi eq, %arg0, %c1_i32_6 : i32
    %14 = arith.extui %13 : i1 to i32
    %c0_i32_7 = arith.constant 0 : i32
    %15 = arith.cmpi ne, %14, %c0_i32_7 : i32
    scf.if %15 {
      %16 = arith.index_cast %arg1 : i32 to index
      %c0 = arith.constant 0 : index
      %c0_8 = arith.constant 0 : index
      %17 = vector.load %arg12[%16, %c0, %c0_8] : memref<1x16x128xbf16, #tpu.memory_space<vmem>>, vector<1x16x128xbf16>
      %18 = vector.shape_cast %17 : vector<1x16x128xbf16> to vector<16x128xbf16>
      %19 = arith.extf %18 : vector<16x128xbf16> to vector<16x128xf32>
      %c0_9 = arith.constant 0 : index
      %c0_10 = arith.constant 0 : index
      %20 = vector.load %arg10[%c0_9, %c0_10] : memref<1x128xf32, #tpu.memory_space<vmem>>, vector<1x128xf32>
      %21 = vector.broadcast %20 : vector<1x128xf32> to vector<16x128xf32>
      %22 = arith.mulf %19, %21 : vector<16x128xf32>
      %c0_11 = arith.constant 0 : index
      %c0_12 = arith.constant 0 : index
      %23 = vector.load %arg11[%c0_11, %c0_12] : memref<1x128xf32, #tpu.memory_space<vmem>>, vector<1x128xf32>
      %24 = vector.broadcast %23 : vector<1x128xf32> to vector<16x128xf32>
      %25 = arith.addf %22, %24 : vector<16x128xf32>
      %cst = arith.constant 0.000000e+00 : f32
      %26 = vector.broadcast %cst : f32 to vector<16x128xf32>
      %27 = arith.maximumf %25, %26 : vector<16x128xf32>
      %28 = arith.truncf %27 : vector<16x128xf32> to vector<16x128xbf16>
      %c0_13 = arith.constant 0 : index
      %c0_14 = arith.constant 0 : index
      %29 = vector.load %arg4[%c0_13, %c0_14] : memref<128x128xbf16, #tpu.memory_space<vmem>>, vector<128x128xbf16>
      %cst_15 = arith.constant dense<0.000000e+00> : vector<16x128xf32>
      %30 = tpu.matmul %28, %29, %cst_15 {dimension_numbers = #tpu.dot_dimension_numbers<[1], [0], [0], [1], [0, 0, 1, 1], [], []>} : vector<16x128xbf16>, vector<128x128xbf16>, vector<16x128xf32> -> vector<16x128xf32>
      %31 = arith.truncf %30 : vector<16x128xf32> to vector<16x128xbf16>
      %c0_16 = arith.constant 0 : index
      %c0_17 = arith.constant 0 : index
      %32 = vector.load %arg7[%c0_16, %c0_17] : memref<16x128xbf16, #tpu.memory_space<vmem>>, vector<16x128xbf16>
      tpu.vector_store %arg7[%c0_16, %c0_17], %31 {strides = array<i32>} : memref<16x128xbf16, #tpu.memory_space<vmem>>, vector<16x128xbf16>,
    } else {
    }
    return
  }
  func.func @transform_0(%arg0: i32, %arg1: i32) -> (i32, i32) {
    %c1_i32 = arith.constant 1 : i32
    %0 = arith.subi %c1_i32, %arg0 : i32
    %1 = arith.muli %0, %arg1 : i32
    %c0_i32 = arith.constant 0 : i32
    %c0_i32_0 = arith.constant 0 : i32
    return %1, %c0_i32 : i32, i32
  }
  func.func @transform_1(%arg0: i32, %arg1: i32) -> (i32, i32) {
    %c0_i32 = arith.constant 0 : i32
    %c0_i32_0 = arith.constant 0 : i32
    %c0_i32_1 = arith.constant 0 : i32
    return %c0_i32, %c0_i32_0 : i32, i32
  }
  func.func @transform_2(%arg0: i32, %arg1: i32) -> (i32, i32) {
    %c0_i32 = arith.constant 0 : i32
    %c0_i32_0 = arith.constant 0 : i32
    %c0_i32_1 = arith.constant 0 : i32
    return %c0_i32, %c0_i32_0 : i32, i32
  }
  func.func @transform_3(%arg0: i32, %arg1: i32) -> (i32, i32) {
    %c0_i32 = arith.constant 0 : i32
    %c0_i32_0 = arith.constant 0 : i32
    %c0_i32_1 = arith.constant 0 : i32
    return %c0_i32, %c0_i32_0 : i32, i32
  }
  func.func @transform_4(%arg0: i32, %arg1: i32) -> (i32, i32) {
    %c0_i32 = arith.constant 0 : i32
    %c0_i32_0 = arith.constant 0 : i32
    %c0_i32_1 = arith.constant 0 : i32
    return %c0_i32, %c0_i32_0 : i32, i32
  }
  func.func @transform_5(%arg0: i32, %arg1: i32) -> (i32, i32) {
    %0 = arith.muli %arg1, %arg0 : i32
    %c0_i32 = arith.constant 0 : i32
    %c0_i32_0 = arith.constant 0 : i32
    return %0, %c0_i32 : i32, i32
  }
}

</mosaic_0001>

<llo_original>
// kernel: tpu_custom_call.1
$region0: #{tpu_custom_call.1}
  #allocation0 [shape = 'u32[]', space=smem, size = 0x4, offset = 0x4, fixed_abs, tag = 'smem constant byte address 0x4 - core index']
  #allocation1 [shape = 'u32[72,128]{1,0:T(1,128)}', space=vmem, size = 0x9000, scoped, tag = 'internal scratch']
  #allocation2 [shape = 'f32[8,128]{1,0:T(8,128)}', space=vmem, size = 0x1000, scoped, tag = 'scratch operand']
  #allocation3 [shape = 'f32[8,128]{1,0:T(8,128)}', space=vmem, size = 0x1000, scoped, tag = 'scratch operand']
  #allocation4 [shape = 'f32[1,128]{1,0:T(1,128)}', space=vmem, size = 0x200, scoped, tag = 'scratch operand']
  #allocation5 [shape = 'f32[1,128]{1,0:T(1,128)}', space=vmem, size = 0x200, scoped, tag = 'scratch operand']
  #allocation6 [shape = 'bf16[1,16,128]{2,1,0:T(8,128)(2,1)}', space=vmem, size = 0x1000, scoped, tag = 'scratch operand']
  %s0 = inlined_call_operand.hbm [shape: f32[8,16], index: 0, kind: input, shape index: {}]
  %s1 = inlined_call_operand.hbm [shape: bf16[16,128], index: 1, kind: input, shape index: {}]
  %s2 = inlined_call_operand.hbm [shape: bf16[128,128], index: 2, kind: input, shape index: {}]
  %s3 = inlined_call_operand.vmem [shape: f32[1,128], index: 3, kind: input, shape index: {}]
  %s4 = inlined_call_operand.vmem [shape: f32[1,128], index: 4, kind: input, shape index: {}]
  %s5 = inlined_call_operand.hbm [shape: bf16[8,128], index: 5, kind: output, shape index: {}]
  %s6 = sld [smem:[#allocation0]]
  $region81: #{tpu_custom_call.1} parent=0
    _
  %s8 = ssub.s32 1, %s6
  %s9 = scalar_select 0, %s8, %s6
  $region1: #{tpu_custom_call.1} parent=0
    #allocation7 [shape = 'u8[16384]{0}', space=vmem, size = 0x4000, scoped, tag = 'input window, operand 0']
    #allocation8 [shape = 's32[2]{0}', space=sflag, size = 0x8, scoped, tag = 'scoped memory for tpu_custom_call.1']
    #allocation9 [shape = 's32[2]{0}', space=sflag, size = 0x8, scoped, tag = 'scoped memory for tpu_custom_call.1']
    #allocation10 [shape = 'u8[4096]{0}', space=vmem, size = 0x1000, scoped, tag = 'input window, operand 1, single buffered']
    #allocation11 [shape = 's32[1]{0}', space=sflag, size = 0x4, scoped, tag = 'scoped memory for tpu_custom_call.1']
    #allocation12 [shape = 'u8[32768]{0}', space=vmem, size = 0x8000, scoped, tag = 'input window, operand 2, single buffered']
    #allocation13 [shape = 'u8[8192]{0}', space=vmem, size = 0x2000, scoped, tag = 'output window, operand 0']
    %10 = vsyncpa [#allocation8], 0
    %s11 = scalar_lea.sflag [#allocation8], 1
    %12 = vsyncpa %s11, 0
    %13 = vsyncpa [#allocation11], 0
    %14 = vsyncpa [#allocation9], 0
    %s15 = scalar_lea.sflag [#allocation9], 1
    %16 = vsyncpa %s15, 0
    loop: start=0, step=1, limit=4
    $region2: #{tpu_custom_call.1} parent=1 // loop_pre_header
      _
    $region3: #{tpu_custom_call.1} parent=1 // loop_header
      %s18 = sphi 0, %s22
      %p19 = scmp.ge.s32.totalorder %s18, 4
      %s25 = sphi 0, %s37
      %s26 = sphi 0, %s33
      %s27 = sphi 0, %s25
      %s28 = sphi 0, %s26
      %s29 = sphi 0, %s27
      %s30 = sphi 0, %s28
      %s44 = sphi 0, %s46
      %s47 = sphi 0, %s44
      %s48 = sphi 0, %s47
      %s64 = sphi 0, %s48
      %s68 = sphi 0, %s68
      %s70 = sphi 0, %s68
      %s71 = sphi 0, %s70
      %s85 = sphi 0, %s71
      %s89 = sphi 0, %s89
      %s91 = sphi 0, %s89
      %s92 = sphi 0, %s91
      %s106 = sphi 0, %s92
      %s110 = sphi 0, %s110
      %s112 = sphi 0, %s110
      %s113 = sphi 0, %s112
      %s127 = sphi 0, %s113
      %s131 = sphi 0, %s131
      %s133 = sphi 0, %s131
      %s134 = sphi 0, %s133
      %s148 = sphi 0, %s134
      %s156 = sphi 0, %s158
      %s159 = sphi 0, %s156
      %s160 = sphi 0, %s159
      %s176 = sphi 0, %s160
    $region4: #{tpu_custom_call.1} parent=1 // loop_header_branch
      %21 = sbr.rel (%p19) target = $region8
    $region5: #{tpu_custom_call.1} parent=1 // loop_body
      %s23 = ssub.s32 %s18, 1
      %s24 = ssub.s32 %s18, 2
      %s31 = sadd.s32 1, %s26
      %p32 = scmp.ge.s32.totalorder %s31, 1
      %s33 = scalar_select %p32, 0, %s31
      %s34 = sadd.s32 1, %s25
      %s35 = scalar_select %p32, %s34, %s25
      %p36 = scmp.ge.s32.totalorder %s35, 2
      %s37 = scalar_select %p36, 0, %s35
      %s38 = ssub.s32 1, %s25
      %s39 = smul.u32 %s38, %s26
      %s40 = ssub.s32 1, %s37
      %s41 = smul.u32 %s40, %s33
      %s42 = ssub.s32 %s39, %s41
      %p43 = scmp.eq.s32.totalorder %s42, 0
      %s45 = sadd.s32 %s44, 1
      %s46 = scalar_select %p43, %s44, %s45
      %p49 = pneg %p43
      %p50 = scmp.eq.s32.totalorder %s18, 1
      %p51 = por %p49, %p50
      %p52 = scmp.ne.s32.totalorder %s44, %s47
      %p53 = scmp.eq.s32.totalorder %s18, 0
      %p54 = por %p52, %p53
      %p55 = scmp.ne.s32.totalorder %s44, %s47
      %p56 = scmp.eq.s32.totalorder %s23, 1
      %p57 = por %p55, %p56
      %p58 = scmp.ne.s32.totalorder %s47, %s48
      %p59 = scmp.eq.s32.totalorder %s23, 0
      %p60 = por %p58, %p59
      %p61 = scmp.ne.s32.totalorder %s47, %s48
      %p62 = scmp.eq.s32.totalorder %s24, 1
      %p63 = por %p61, %p62
      %p65 = scmp.ne.s32.totalorder %s48, %s64
      %p66 = scmp.eq.s32.totalorder %s24, 0
      %p67 = por %p65, %p66
      %s69 = sadd.s32 %s68, 1
      %p72 = scmp.eq.s32.totalorder %s18, 1
      %p73 = scmp.ne.s32.totalorder %s68, %s70
      %p74 = scmp.eq.s32.totalorder %s18, 0
      %p75 = por %p73, %p74
      %p76 = scmp.ne.s32.totalorder %s68, %s70
      %p77 = scmp.eq.s32.totalorder %s23, 1
      %p78 = por %p76, %p77
      %p79 = scmp.ne.s32.totalorder %s70, %s71
      %p80 = scmp.eq.s32.totalorder %s23, 0
      %p81 = por %p79, %p80
      %p82 = scmp.ne.s32.totalorder %s70, %s71
      %p83 = scmp.eq.s32.totalorder %s24, 1
      %p84 = por %p82, %p83
      %p86 = scmp.ne.s32.totalorder %s71, %s85
      %p87 = scmp.eq.s32.totalorder %s24, 0
      %p88 = por %p86, %p87
      %s90 = sadd.s32 %s89, 1
      %p93 = scmp.eq.s32.totalorder %s18, 1
      %p94 = scmp.ne.s32.totalorder %s89, %s91
      %p95 = scmp.eq.s32.totalorder %s18, 0
      %p96 = por %p94, %p95
      %p97 = scmp.ne.s32.totalorder %s89, %s91
      %p98 = scmp.eq.s32.totalorder %s23, 1
      %p99 = por %p97, %p98
      %p100 = scmp.ne.s32.totalorder %s91, %s92
      %p101 = scmp.eq.s32.totalorder %s23, 0
      %p102 = por %p100, %p101
      %p103 = scmp.ne.s32.totalorder %s91, %s92
      %p104 = scmp.eq.s32.totalorder %s24, 1
      %p105 = por %p103, %p104
      %p107 = scmp.ne.s32.totalorder %s92, %s106
      %p108 = scmp.eq.s32.totalorder %s24, 0
      %p109 = por %p107, %p108
      %s111 = sadd.s32 %s110, 1
      %p114 = scmp.eq.s32.totalorder %s18, 1
      %p115 = scmp.ne.s32.totalorder %s110, %s112
      %p116 = scmp.eq.s32.totalorder %s18, 0
      %p117 = por %p115, %p116
      %p118 = scmp.ne.s32.totalorder %s110, %s112
      %p119 = scmp.eq.s32.totalorder %s23, 1
      %p120 = por %p118, %p119
      %p121 = scmp.ne.s32.totalorder %s112, %s113
      %p122 = scmp.eq.s32.totalorder %s23, 0
      %p123 = por %p121, %p122
      %p124 = scmp.ne.s32.totalorder %s112, %s113
      %p125 = scmp.eq.s32.totalorder %s24, 1
      %p126 = por %p124, %p125
      %p128 = scmp.ne.s32.totalorder %s113, %s127
      %p129 = scmp.eq.s32.totalorder %s24, 0
      %p130 = por %p128, %p129
      %s132 = sadd.s32 %s131, 1
      %p135 = scmp.eq.s32.totalorder %s18, 1
      %p136 = scmp.ne.s32.totalorder %s131, %s133
      %p137 = scmp.eq.s32.totalorder %s18, 0
      %p138 = por %p136, %p137
      %p139 = scmp.ne.s32.totalorder %s131, %s133
      %p140 = scmp.eq.s32.totalorder %s23, 1
      %p141 = por %p139, %p140
      %p142 = scmp.ne.s32.totalorder %s133, %s134
      %p143 = scmp.eq.s32.totalorder %s23, 0
      %p144 = por %p142, %p143
      %p145 = scmp.ne.s32.totalorder %s133, %s134
      %p146 = scmp.eq.s32.totalorder %s24, 1
      %p147 = por %p145, %p146
      %p149 = scmp.ne.s32.totalorder %s134, %s148
      %p150 = scmp.eq.s32.totalorder %s24, 0
      %p151 = por %p149, %p150
      %s152 = smul.u32 %s26, %s25
      %s153 = smul.u32 %s33, %s37
      %s154 = ssub.s32 %s152, %s153
      %p155 = scmp.eq.s32.totalorder %s154, 0
      %s157 = sadd.s32 %s156, 1
      %s158 = scalar_select %p155, %s156, %s157
      %p161 = pneg %p155
      %p162 = scmp.eq.s32.totalorder %s18, 1
      %p163 = por %p161, %p162
      %p164 = scmp.ne.s32.totalorder %s156, %s159
      %p165 = scmp.eq.s32.totalorder %s18, 0
      %p166 = por %p164, %p165
      %p167 = scmp.ne.s32.totalorder %s156, %s159
      %p168 = scmp.eq.s32.totalorder %s23, 1
      %p169 = por %p167, %p168
      %p170 = scmp.ne.s32.totalorder %s159, %s160
      %p171 = scmp.eq.s32.totalorder %s23, 0
      %p172 = por %p170, %p171
      %p173 = scmp.ne.s32.totalorder %s159, %s160
      %p174 = scmp.eq.s32.totalorder %s24, 1
      %p175 = por %p173, %p174
      %p177 = scmp.ne.s32.totalorder %s160, %s176
      %p178 = scmp.eq.s32.totalorder %s24, 0
      %p179 = por %p177, %p178
      %p180 = scmp.le.s32.totalorder 1, %s18
      %p181 = scmp.lt.s32.totalorder %s18, 3
      %p182 = pnand %p180, %p181
      %p183 = pneg %p182
      // Predicated region
      $region9: #{tpu_custom_call.1} parent=5 // pred_check
        _
      $region10: #{tpu_custom_call.1} parent=5 // pred_check_branch
        %185 = sbr.rel (%p182) target = $region12
      $region11: #{tpu_custom_call.1} parent=5 // pred_region
        %s186 = ssub.s32 %s18, 1
        // Predicated region
        $region13: #{tpu_custom_call.1} parent=11 // pred_check
          %p187 = pneg %p81
        $region14: #{tpu_custom_call.1} parent=11 // pred_check_branch
          %189 = sbr.rel (%p187) target = $region16
        $region15: #{tpu_custom_call.1} parent=11 // pred_region
          %191 = vsyncadd [#allocation11], 0
          %s192 = sshll.u32 %s1, 4
          %s193 = int_to_ptr.hbm [resolvable:$true] %s192
          %s194 = sshll.u32 [#allocation10], 4
          %s195 = int_to_ptr.vmem [resolvable:$true] %s194
          %200 = dma.hbm_to_vmem [thread:$0]  %s193, 128, %s195, [#allocation11], 64, 64, 4
        $region16: #{tpu_custom_call.1} parent=11 // pred_fallthru
          _
        // Predicated region
        $region17: #{tpu_custom_call.1} parent=11 // pred_check
          %p201 = pneg %p102
        $region18: #{tpu_custom_call.1} parent=11 // pred_check_branch
          %203 = sbr.rel (%p201) target = $region20
        $region19: #{tpu_custom_call.1} parent=11 // pred_region
          %205 = vsyncadd [#allocation11], 0
          %s206 = sshll.u32 %s2, 4
          %s207 = int_to_ptr.hbm [resolvable:$true] %s206
          %s208 = sshll.u32 [#allocation12], 4
          %s209 = int_to_ptr.vmem [resolvable:$true] %s208
          %214 = dma.hbm_to_vmem [thread:$0]  %s207, 1024, %s209, [#allocation11], 64, 64, 4
        $region20: #{tpu_custom_call.1} parent=11 // pred_fallthru
          _
        // Predicated region
        $region21: #{tpu_custom_call.1} parent=11 // pred_check
          %p215 = pneg %p123
        $region22: #{tpu_custom_call.1} parent=11 // pred_check_branch
          %217 = sbr.rel (%p215) target = $region24
        $region23: #{tpu_custom_call.1} parent=11 // pred_region
          _
        $region24: #{tpu_custom_call.1} parent=11 // pred_fallthru
          _
        // Predicated region
        $region25: #{tpu_custom_call.1} parent=11 // pred_check
          %p218 = pneg %p144
        $region26: #{tpu_custom_call.1} parent=11 // pred_check_branch
          %220 = sbr.rel (%p218) target = $region28
        $region27: #{tpu_custom_call.1} parent=11 // pred_region
          _
        $region28: #{tpu_custom_call.1} parent=11 // pred_fallthru
          _
      $region12: #{tpu_custom_call.1} parent=5 // pred_fallthru
        _
      %p221 = scmp.lt.s32.totalorder %s18, 2
      // Predicated region
      $region29: #{tpu_custom_call.1} parent=5 // pred_check
        %p222 = pneg %p221
      $region30: #{tpu_custom_call.1} parent=5 // pred_check_branch
        %224 = sbr.rel (%p222) target = $region32
      $region31: #{tpu_custom_call.1} parent=5 // pred_region
        // Predicated region
        $region33: #{tpu_custom_call.1} parent=31 // pred_check
          %p225 = pneg %p54
        $region34: #{tpu_custom_call.1} parent=31 // pred_check_branch
          %227 = sbr.rel (%p225) target = $region36
        $region35: #{tpu_custom_call.1} parent=31 // pred_region
          %s228 = sand.u32 %s44, 1
          %s229 = scalar_lea.sflag [#allocation8], %s228
          %s230 = sand.u32 %s44, 1
          %s231 = smul.addr %s230, 16
          %s232 = scalar_lea.vmem [#allocation7], %s231
          %s233 = ssub.s32 1, %s25
          %s234 = smul.u32 %s233, %s26
          %s235 = smul.u32 2, %s234
          %s236 = ssub.s32 1, %s235
          %s237 = smul.u32 8, %s236
          %s238 = ssub.s32 16, %s237
          %s239 = sshll.u32 %s238, 4
          %240 = vsyncadd %s229, %s239
          %p241 = scmp.ne.s32.totalorder 0, %s237
          %s242 = smul.addr %s235, 8
          %s243 = scalar_lea.hbm %s0, %s242
          %s244 = smul.u32 8, %s236
          %s245 = sshll.u32 %s243, 4
          %s246 = int_to_ptr.hbm [resolvable:$true] %s245
          %s247 = sshll.u32 %s232, 4
          %s248 = int_to_ptr.vmem [resolvable:$true] %s247
          %s249 = sshll.u32 %s244, 4
          %253 = dma.hbm_to_vmem [thread:$0]  (%p241), %s246, %s249, %s248, %s229, 128, 128, 8
        $region36: #{tpu_custom_call.1} parent=31 // pred_fallthru
          _
      $region32: #{tpu_custom_call.1} parent=5 // pred_fallthru
        _
      %p254 = scmp.le.s32.totalorder 1, %s18
      %p255 = scmp.lt.s32.totalorder %s18, 3
      %p256 = pnand %p254, %p255
      %p257 = pneg %p256
      // Predicated region
      $region37: #{tpu_custom_call.1} parent=5 // pred_check
        _
      $region38: #{tpu_custom_call.1} parent=5 // pred_check_branch
        %259 = sbr.rel (%p256) target = $region40
      $region39: #{tpu_custom_call.1} parent=5 // pred_region
        %s260 = ssub.s32 %s18, 1
        %s261 = sand.u32 %s47, 1
        %s262 = scalar_lea.sflag [#allocation8], %s261
        %s263 = sand.u32 %s47, 1
        %s264 = smul.addr %s263, 16
        %s265 = scalar_lea.vmem [#allocation7], %s264
        // Predicated region
        $region41: #{tpu_custom_call.1} parent=39 // pred_check
          %p266 = pneg %p60
        $region42: #{tpu_custom_call.1} parent=39 // pred_check_branch
          %268 = sbr.rel (%p266) target = $region44
        $region43: #{tpu_custom_call.1} parent=39 // pred_region
          %270 = dma.done %s262, 256
        $region44: #{tpu_custom_call.1} parent=39 // pred_fallthru
          _
        // Predicated region
        $region45: #{tpu_custom_call.1} parent=39 // pred_check
          %p271 = pneg %p81
        $region46: #{tpu_custom_call.1} parent=39 // pred_check_branch
          %273 = sbr.rel (%p271) target = $region48
        $region47: #{tpu_custom_call.1} parent=39 // pred_region
          %275 = dma.done [#allocation11], 128
        $region48: #{tpu_custom_call.1} parent=39 // pred_fallthru
          _
        // Predicated region
        $region49: #{tpu_custom_call.1} parent=39 // pred_check
          %p276 = pneg %p102
        $region50: #{tpu_custom_call.1} parent=39 // pred_check_branch
          %278 = sbr.rel (%p276) target = $region52
        $region51: #{tpu_custom_call.1} parent=39 // pred_region
          %280 = dma.done [#allocation11], 1024
        $region52: #{tpu_custom_call.1} parent=39 // pred_fallthru
          _
        %s281 = sand.u32 %s47, 1
        %s282 = scalar_lea.sflag [#allocation8], %s281
        %s283 = sand.u32 %s47, 1
        %s284 = smul.addr %s283, 16
        %s285 = scalar_lea.vmem [#allocation7], %s284
        %p286 = pneg %p60
        %p287 = pneg %p57
        %p288 = pneg %p81
        %p289 = pneg %p78
        %p290 = pneg %p102
        %p291 = pneg %p99
        %p292 = pneg %p123
        %p293 = pneg %p120
        %p294 = pneg %p144
        %p295 = pneg %p141
        %p296 = pneg %p172
        %p297 = pneg %p169
        %s298 = sand.u32 %s159, 1
        %s299 = scalar_lea.sflag [#allocation9], %s298
        %s300 = sand.u32 %s159, 1
        %s301 = smul.addr %s300, 8
        %s302 = scalar_lea.vmem [#allocation13], %s301
        %s303 = ssub.s32 1, %s27
        %s304 = smul.u32 %s303, %s28
        %s305 = smul.u32 2, %s304
        %s306 = ssub.s32 1, %s305
        %s307 = smul.u32 8, %s306
        %s308 = smul.u32 %s28, %s27
        %s309 = smul.u32 2, %s308
        %s310 = ssub.s32 1, %s309
        %s311 = smul.u32 4, %s310
        %p313 = scmp.eq.s32.totalorder %s27, 0
        %p314 = scmp.eq.s32.totalorder %s28, 0
        %p315 = pnand %p313, %p314
        %p316 = pneg %p315
        // Predicated region
        $region53: #{tpu_custom_call.1} parent=39 // pred_check
          _
        $region54: #{tpu_custom_call.1} parent=39 // pred_check_branch
          %318 = sbr.rel (%p315) target = $region56
        $region55: #{tpu_custom_call.1} parent=39 // pred_region
          %319 = vst [vmem:[#allocation2] sm:$0xff] 0.0
          %320 = vst [vmem:[#allocation3] sm:$0xff] 0.0
        $region56: #{tpu_custom_call.1} parent=39 // pred_fallthru
          _
        // Predicated region
        $region57: #{tpu_custom_call.1} parent=39 // pred_check
          %p321 = pneg %p313
        $region58: #{tpu_custom_call.1} parent=39 // pred_check_branch
          %323 = sbr.rel (%p321) target = $region60
        $region59: #{tpu_custom_call.1} parent=39 // pred_region
          %v324 = vld [vmem:[%s265] sm:$0xff]
          %v325 = vld [vmem:[%s265 + $0x8] sm:$0xff]
          %v326 = vpack.c.bf16 %v325, %v324
          %v327 = vld [vmem:[#allocation10] sm:$0xf]
          %v328 = vld [vmem:[#allocation10 + $0x4] sm:$0xf]
          %v331 = vunpack.c.l.b16 %v327
          %v332 = vunpack.c.l.b16 %v328
          %v333 = vpack.c.b16 %v332, %v331
          %vm335 = vcmask 130048
          %v337 = vsel %vm335, %v326, 0
          %339 = vmatpush.bf16.msra.mxu0 0
          %340 = vmatpush.bf16.msra.mxu0 0
          %341 = vmatpush.bf16.msra.mxu0 0
          %342 = vmatpush.bf16.msra.mxu0 0
          %343 = vmatpush.bf16.msra.mxu0 0
          %344 = vmatpush.bf16.msra.mxu0 0
          %345 = vmatpush.bf16.msra.mxu0 0
          %346 = vmatpush.bf16.msra.mxu0 %v333
          %347 = vmatmul.bf16.gmra.mxu0 %v337
          %v348 = vpop.f32.mrf.mxu0
          %v349 = vadd.f32 0.0, %v348
          %v350 = vpop.f32.mrf.mxu0
          %v351 = vadd.f32 0.0, %v350
          %352 = vdwg.mxu0
          %s353 = smul.u32 %s28, 16
          %v354 = vlaneseq
          %v355 = vshrl.u32 %v354, 7
          %v356 = vadd.s32 %v355, 8
          %v357 = vstv %s353
          %v358 = vadd.s32 %v357, %v355
          %v359 = vadd.s32 %v357, %v356
          %vm360 = vcmp.lt.s32.totalorder %v358, 8
          %vm361 = vcmp.lt.s32.totalorder %v359, 8
          %v362 = vsel %vm360, %v349, 0.0
          %v363 = vsel %vm361, %v351, 0.0
          %v364 = vpack.c.bf16 %v362, %v362
          %v365 = vpack.c.bf16 %v363, %v363
          %s366 = smul.u32 %s28, 2
          %s367 = smul.addr %s366, 4
          %s368 = scalar_lea.vmem [#allocation6], %s367
          %369 = vst [vmem:[%s368] sm:$0xf] %v364
          %370 = vst [vmem:[%s368 + $0x4] sm:$0xf] %v365
          %v371 = vld [vmem:[#allocation2] sm:$0xff]
          %v372 = vadd.f32 %v362, %v363
          %v373 = vadd.f32 %v371, %v372
          %374 = vst [vmem:[#allocation2] sm:$0xff] %v373
          %v375 = vld [vmem:[#allocation3] sm:$0xff]
          %v376 = vmul.f32 %v362, %v362
          %v377 = vmul.f32 %v363, %v363
          %v378 = vadd.f32 %v376, %v377
          %v379 = vadd.f32 %v375, %v378
          %380 = vst [vmem:[#allocation3] sm:$0xff] %v379
        $region60: #{tpu_custom_call.1} parent=39 // pred_fallthru
          _
        %p381 = scmp.eq.s32.totalorder %s27, 1
        %p382 = pnand %p381, %p314
        %p383 = pneg %p382
        // Predicated region
        $region61: #{tpu_custom_call.1} parent=39 // pred_check
          _
        $region62: #{tpu_custom_call.1} parent=39 // pred_check_branch
          %385 = sbr.rel (%p382) target = $region64
        $region63: #{tpu_custom_call.1} parent=39 // pred_region
          %v386 = vld [vmem:[#allocation2] sm:$0xff]
          %v387 = vrot.slane %v386, 4
          %v388 = vadd.f32 %v386, %v387
          %v389 = vrot.slane %v388, 2
          %v390 = vadd.f32 %v388, %v389
          %v391 = vrot.slane %v390, 1
          %v392 = vadd.f32 %v390, %v391
          %v393 = vld [vmem:[#allocation3] sm:$0xff]
          %v394 = vrot.slane %v393, 4
          %v395 = vadd.f32 %v393, %v394
          %v396 = vrot.slane %v395, 2
          %v397 = vadd.f32 %v395, %v396
          %v398 = vrot.slane %v397, 1
          %v399 = vadd.f32 %v397, %v398
          %v400 = vmul.f32 %v392, 0.125
          %v401 = vmul.f32 %v399, 0.125
          %v402 = vmul.f32 %v400, %v400
          %v403 = vsub.f32 %v401, %v402
          %v404 = vmax.f32 %v403, 0.0
          %v405 = vld [vmem:[%s3] sm:$0x1]
          %v406 = vadd.f32 %v404, 1e-05
          %v407 = vrsqrt.pop %v406
          %v408 = vmul.f32 %v407, %v406
          %v409 = vmul.f32 %v408, %v407
          %v410 = vmul.f32 0.5, %v409
          %v411 = vsub.f32 1.5, %v410
          %v412 = vmul.f32 %v407, %v411
          %vm413 = vweird.f32 %v406
          %vm414 = vweird.f32 %v407
          %vm415 = vmor %vm413, %vm414
          %v416 = vsel %vm415, %v407, %v412
          %v417 = vmul.f32 %v405, %v416
          %418 = vst [vmem:[#allocation4] sm:$0x1] %v417
          %v419 = vld [vmem:[%s4] sm:$0x1]
          %v420 = vmul.f32 %v400, %v417
          %v421 = vsub.f32 %v419, %v420
          %422 = vst [vmem:[#allocation5] sm:$0x1] %v421
        $region64: #{tpu_custom_call.1} parent=39 // pred_fallthru
          _
        // Predicated region
        $region65: #{tpu_custom_call.1} parent=39 // pred_check
          %p423 = pneg %p381
        $region66: #{tpu_custom_call.1} parent=39 // pred_check_branch
          %425 = sbr.rel (%p423) target = $region68
        $region67: #{tpu_custom_call.1} parent=39 // pred_region
          %s426 = smul.u32 %s28, 2
          %s427 = smul.addr %s426, 4
          %s428 = scalar_lea.vmem [#allocation6], %s427
          %v429 = vld [vmem:[%s428] sm:$0xf]
          %v430 = vld [vmem:[%s428 + $0x4] sm:$0xf]
          %v431 = vunpack.c.l.bf16 %v429
          %v432 = vunpack.c.l.bf16 %v430
          %v433 = vld [vmem:[#allocation4] sm:$0x1]
          %v435 = vperm.slane %v433, 0
          %v437 = vmul.f32 %v431, %v435
          %v438 = vmul.f32 %v432, %v435
          %v439 = vld [vmem:[#allocation5] sm:$0x1]
          %v441 = vperm.slane %v439, 0
          %v443 = vadd.f32 %v437, %v441
          %v444 = vadd.f32 %v438, %v441
          %v445 = vmax.f32 %v443, 0.0
          %v446 = vmax.f32 %v444, 0.0
          %v447 = vpack.c.bf16 %v446, %v445
          %v448 = vld [vmem:[#allocation12] sm:$0xf]
          %v449 = vld [vmem:[#allocation12 + $0x4] sm:$0xf]
          %v450 = vld [vmem:[#allocation12 + $0x8] sm:$0xf]
          %v451 = vld [vmem:[#allocation12 + $0xc] sm:$0xf]
          %v452 = vld [vmem:[#allocation12 + $0x10] sm:$0xf]
          %v453 = vld [vmem:[#allocation12 + $0x14] sm:$0xf]
          %v454 = vld [vmem:[#allocation12 + $0x18] sm:$0xf]
          %v455 = vld [vmem:[#allocation12 + $0x1c] sm:$0xf]
          %v456 = vld [vmem:[#allocation12 + $0x20] sm:$0xf]
          %v457 = vld [vmem:[#allocation12 + $0x24] sm:$0xf]
          %v458 = vld [vmem:[#allocation12 + $0x28] sm:$0xf]
          %v459 = vld [vmem:[#allocation12 + $0x2c] sm:$0xf]
          %v460 = vld [vmem:[#allocation12 + $0x30] sm:$0xf]
          %v461 = vld [vmem:[#allocation12 + $0x34] sm:$0xf]
          %v462 = vld [vmem:[#allocation12 + $0x38] sm:$0xf]
          %v463 = vld [vmem:[#allocation12 + $0x3c] sm:$0xf]
          %v480 = vunpack.c.l.b16 %v448
          %v481 = vunpack.c.l.b16 %v449
          %v482 = vunpack.c.l.b16 %v450
          %v483 = vunpack.c.l.b16 %v451
          %v484 = vunpack.c.l.b16 %v452
          %v485 = vunpack.c.l.b16 %v453
          %v486 = vunpack.c.l.b16 %v454
          %v487 = vunpack.c.l.b16 %v455
          %v488 = vunpack.c.l.b16 %v456
          %v489 = vunpack.c.l.b16 %v457
          %v490 = vunpack.c.l.b16 %v458
          %v491 = vunpack.c.l.b16 %v459
          %v492 = vunpack.c.l.b16 %v460
          %v493 = vunpack.c.l.b16 %v461
          %v494 = vunpack.c.l.b16 %v462
          %v495 = vunpack.c.l.b16 %v463
          %v496 = vpack.c.b16 %v481, %v480
          %v497 = vpack.c.b16 %v483, %v482
          %v498 = vpack.c.b16 %v485, %v484
          %v499 = vpack.c.b16 %v487, %v486
          %v500 = vpack.c.b16 %v489, %v488
          %v501 = vpack.c.b16 %v491, %v490
          %v502 = vpack.c.b16 %v493, %v492
          %v503 = vpack.c.b16 %v495, %v494
          %512 = vmatpush.bf16.msra.mxu0 %v503
          %513 = vmatpush.bf16.msra.mxu0 %v502
          %514 = vmatpush.bf16.msra.mxu0 %v501
          %515 = vmatpush.bf16.msra.mxu0 %v500
          %516 = vmatpush.bf16.msra.mxu0 %v499
          %517 = vmatpush.bf16.msra.mxu0 %v498
          %518 = vmatpush.bf16.msra.mxu0 %v497
          %519 = vmatpush.bf16.msra.mxu0 %v496
          %520 = vmatmul.bf16.gmra.mxu0 %v447
          %v521 = vpop.f32.mrf.mxu0
          %v522 = vadd.f32 0.0, %v521
          %v523 = vpop.f32.mrf.mxu0
          %v524 = vadd.f32 0.0, %v523
          %525 = vdwg.mxu0
          %v526 = vpack.c.bf16 %v522, %v522
          %v527 = vpack.c.bf16 %v524, %v524
          %528 = vst [vmem:[%s302] sm:$0xf] %v526
          %529 = vst [vmem:[%s302 + $0x4] sm:$0xf] %v527
        $region68: #{tpu_custom_call.1} parent=39 // pred_fallthru
          _
        %s530 = sand.u32 %s159, 1
        %s531 = scalar_lea.sflag [#allocation9], %s530
        %s532 = sand.u32 %s159, 1
        %s533 = smul.addr %s532, 8
        %s534 = scalar_lea.vmem [#allocation13], %s533
        // Predicated region
        $region69: #{tpu_custom_call.1} parent=39 // pred_check
          %p535 = pneg %p169
        $region70: #{tpu_custom_call.1} parent=39 // pred_check_branch
          %537 = sbr.rel (%p535) target = $region72
        $region71: #{tpu_custom_call.1} parent=39 // pred_region
          %s538 = smul.u32 %s28, %s27
          %s539 = smul.u32 2, %s538
          %s540 = ssub.s32 1, %s539
          %s541 = smul.u32 4, %s540
          %s542 = ssub.s32 8, %s541
          %s543 = sshll.u32 %s542, 4
          %544 = vsyncadd %s531, %s543
          %p545 = scmp.ne.s32.totalorder 0, %s541
          %s546 = smul.addr %s539, 4
          %s547 = scalar_lea.hbm %s5, %s546
          %s548 = smul.u32 4, %s540
          %s549 = sshll.u32 %s534, 4
          %s550 = int_to_ptr.vmem [resolvable:$true] %s549
          %s551 = sshll.u32 %s547, 4
          %s552 = int_to_ptr.hbm [resolvable:$true] %s551
          %s553 = sshll.u32 %s548, 4
          %557 = dma.vmem_to_hbm [thread:$0]  (%p545), %s550, %s553, %s552, %s531, 64, 64, 4
        $region72: #{tpu_custom_call.1} parent=39 // pred_fallthru
          _
      $region40: #{tpu_custom_call.1} parent=5 // pred_fallthru
        _
      %p558 = scmp.le.s32.totalorder 2, %s18
      // Predicated region
      $region73: #{tpu_custom_call.1} parent=5 // pred_check
        %p559 = pneg %p558
      $region74: #{tpu_custom_call.1} parent=5 // pred_check_branch
        %561 = sbr.rel (%p559) target = $region76
      $region75: #{tpu_custom_call.1} parent=5 // pred_region
        %s562 = ssub.s32 %s18, 2
        // Predicated region
        $region77: #{tpu_custom_call.1} parent=75 // pred_check
          %p563 = pneg %p175
        $region78: #{tpu_custom_call.1} parent=75 // pred_check_branch
          %565 = sbr.rel (%p563) target = $region80
        $region79: #{tpu_custom_call.1} parent=75 // pred_region
          %s566 = sand.u32 %s160, 1
          %s567 = scalar_lea.sflag [#allocation9], %s566
          %s568 = sand.u32 %s160, 1
          %s569 = smul.addr %s568, 8
          %s570 = scalar_lea.vmem [#allocation13], %s569
          %572 = dma.done %s567, 128
        $region80: #{tpu_custom_call.1} parent=75 // pred_fallthru
          _
      $region76: #{tpu_custom_call.1} parent=5 // pred_fallthru
        _
    $region6: #{tpu_custom_call.1} parent=1 // loop_footer
      %s22 = sadd.s32 1, %s18
    $region7: #{tpu_custom_call.1} parent=1 // loop_footer_branch
      %17 = sbr.rel target = $region3
    $region8: #{tpu_custom_call.1} parent=1 // loop_exit
      _
    %573 = vsyncpa [#allocation8], 1
    %s574 = scalar_lea.sflag [#allocation8], 1
    %575 = vsyncpa %s574, 1
    %576 = vsyncpa [#allocation11], 1
    %577 = vsyncpa [#allocation9], 1
    %s578 = scalar_lea.sflag [#allocation9], 1
    %579 = vsyncpa %s578, 1

</llo_original>
